<compile_context>
chip_gen: v6e
topology: v6e:2x2x1
jax: 0.10.0
libtpu: 0.0.40
codegen_flags: <defaults>
</compile_context>

<pallas_src>
import jax
import jax.numpy as jnp
from jax.experimental import pallas as pl
from jax.experimental.pallas import tpu as pltpu

# ----------------------------- problem sizes --------------------------------
N, C_IN, H, W = 2, 4, 16, 16
C_OUT, KH, KW = 8, 3, 3
PATCH = C_IN * KH * KW        # 36, ordered (c, i, j) with (i, j) fastest
PATCH_PAD = 48                # zero-padded K: multiple of 16 (bf16 sublane packing)
HW = H * W                    # 256
NHW = N * HW                  # 512 lanes -> 4 full unmasked vregs per output row


# ------------------------------ Pallas kernel -------------------------------
def conv_mm_relu_kernel(x_ref, w_ref, b_ref, o_ref):
    # x_ref: (PATCH_PAD, NHW) bf16   im2col patches, batch folded into lanes
    # w_ref: (C_OUT, PATCH_PAD) bf16 conv weight in matmul form (zero-padded K)
    # b_ref: (C_OUT, 1) f32          bias column
    # o_ref: (C_OUT, NHW) f32        lane-dense output (512 lanes -> unmasked vst)
    acc = jnp.dot(w_ref[...], x_ref[...], preferred_element_type=jnp.float32)
    o_ref[...] = jnp.maximum(acc + b_ref[...], 0.0)


def conv_relu_pallas(patches_bf16, w_bf16, b_col):
    flops = 2 * C_OUT * PATCH_PAD * NHW + 2 * C_OUT * NHW      # matmul + bias/relu
    bytes_accessed = (2 * (patches_bf16.size + w_bf16.size)    # bf16 inputs
                      + 4 * (b_col.size + C_OUT * NHW))        # f32 bias + output
    return pl.pallas_call(
        conv_mm_relu_kernel,
        out_shape=jax.ShapeDtypeStruct((C_OUT, NHW), jnp.float32),
        # No grid: whole problem (~50 KiB) as a single un-pipelined invocation.
        in_specs=[
            pl.BlockSpec(memory_space=pltpu.MemorySpace.VMEM),
            pl.BlockSpec(memory_space=pltpu.MemorySpace.VMEM),
            pl.BlockSpec(memory_space=pltpu.MemorySpace.VMEM),
        ],
        out_specs=pl.BlockSpec(memory_space=pltpu.MemorySpace.VMEM),
        cost_estimate=pl.CostEstimate(
            flops=flops, transcendentals=0, bytes_accessed=bytes_accessed),
    )(patches_bf16, w_bf16, b_col)


# ------------------------------ host-side glue -------------------------------
def im2col_lanes(x_nchw):
    # 3x3, stride 1, pad 1, operating directly on NCHW.  Patch dim ordered
    # (c, i, j) with (i, j) fastest -> PyTorch OIHW weight reshapes directly
    # to (C_OUT, PATCH).  Batch is folded into the lane axis: (PATCH, N*HW).
    n, c, h, w = x_nchw.shape
    xp = jnp.pad(x_nchw, ((0, 0), (0, 0), (1, 1), (1, 1)))
    cols = [xp[:, :, i:i + h, j:j + w] for i in range(KH) for j in range(KW)]
    patches = jnp.stack(cols, axis=2)                          # (N, C_IN, 9, H, W)
    patches = patches.reshape(n, PATCH, h * w)                 # (N, PATCH, HW)
    patches = patches.transpose(1, 0, 2).reshape(PATCH, n * h * w)   # (PATCH, N*HW)
    # Zero-pad contraction dim 36 -> 48: dense, unmasked bf16 layout; zeros
    # contribute nothing to the dot.
    return jnp.pad(patches, ((0, PATCH_PAD - PATCH), (0, 0)))


@jax.jit
def _forward_nchw(x_nchw, w_bf16, b_col):
    n = x_nchw.shape[0]
    patches = im2col_lanes(x_nchw).astype(jnp.bfloat16)        # (PATCH_PAD, N*HW) bf16
    out = conv_relu_pallas(patches, w_bf16, b_col)             # (C_OUT, N*HW) f32
    # 16 KiB fix-up transpose back to NCHW; fuses under this jit.
    return out.reshape(C_OUT, n, H, W).transpose(1, 0, 2, 3)   # (N, C_OUT, H, W)


class SyntheticConvModel:
    """The wrapped `model`: Conv2d(C_IN, C_OUT, 3, padding=1) + ReLU, NCHW in/out."""

    def __init__(self, key):
        kw_, kb_ = jax.random.split(key)
        # PyTorch Conv2d weight layout: (C_OUT, C_IN, KH, KW)
        self.weight = jax.random.normal(kw_, (C_OUT, C_IN, KH, KW), jnp.float32) * 0.1
        self.bias = jax.random.normal(kb_, (C_OUT,), jnp.float32) * 0.1
        # Matmul form matching im2col (c, i, j) ordering: direct reshape, then
        # zero-pad K to PATCH_PAD and cast to bf16 once (MXU input dtype).
        w_mat = self.weight.reshape(C_OUT, PATCH)
        self._w_bf16 = jnp.pad(w_mat, ((0, 0), (0, PATCH_PAD - PATCH))).astype(jnp.bfloat16)
        # Bias stays f32 and is added to the f32 accumulator (single VPU add);
        # per review it is NOT folded into the matmul (would break K alignment).
        self._b_col = self.bias.reshape(C_OUT, 1)

    def __call__(self, x_nchw):
        return _forward_nchw(x_nchw, self._w_bf16, self._b_col)


class CustomDataParallel:
    """JAX analogue of _CustomDataParallel: pure pass-through wrapper.

    nn.DataParallel's batch scatter/gather is the identity on the math; the
    whole batch runs as one un-gridded Pallas invocation.  A parallel batch
    grid axis (v7x's 2 TensorCores) only pays off once per-shard work exceeds
    the ~0.35 us per-step overhead, i.e. at ~100x larger problem sizes.
    """

    def __init__(self, model):
        self._model = model
        # TODO(synk): .cuda() device placement and multi-GPU replication have no
        # single-host Pallas equivalent; the fused batch kernel stands in for it.

    def forward(self, *inputs):
        return self._model(*inputs)

    __call__ = forward

    def __getattr__(self, name):
        # mirror _CustomDataParallel.__getattr__ fallback to the wrapped module
        return getattr(object.__getattribute__(self, "_model"), name)


# --------------------------------- main --------------------------------------
if __name__ == "__main__":
    key = jax.random.PRNGKey(0)
    k_model, k_x = jax.random.split(key)

    model = SyntheticConvModel(k_model)
    dp = CustomDataParallel(model)

    x = jax.random.normal(k_x, (N, C_IN, H, W), jnp.float32)   # NCHW, like PyTorch

    out = dp(x)
    out = jax.block_until_ready(out)
    assert out.shape == (N, C_OUT, H, W), out.shape

    # reference check with plain-JAX f32 conv (same semantics as torch Conv2d + ReLU);
    # tolerance loosened because kernel inputs are bf16 (f32 accumulation).
    ref = jax.lax.conv_general_dilated(
        x, model.weight, window_strides=(1, 1), padding=((1, 1), (1, 1)),
        dimension_numbers=("NCHW", "OIHW", "NCHW"))
    ref = jnp.maximum(ref + model.bias.reshape(1, C_OUT, 1, 1), 0.0)
    assert jnp.allclose(out, ref, atol=2e-2, rtol=2e-2), float(jnp.max(jnp.abs(out - ref)))

    print("KERNEL_OK")
</pallas_src>

<mosaic_0001>
module attributes {stable_mosaic.version = 11 : i64} {
  func.func @conv_mm_relu_kernel(%arg0: memref<48x512xbf16, #tpu.memory_space<vmem>>, %arg1: memref<8x48xbf16, #tpu.memory_space<vmem>>, %arg2: memref<8x1xf32, #tpu.memory_space<vmem>>, %arg3: memref<8x512xf32, #tpu.memory_space<vmem>>) attributes {dimension_semantics = [], scalar_prefetch = 0 : i64, scratch_operands = 0 : i64, tpu.core_type = #tpu.core_type<tc>} {
    %c0 = arith.constant 0 : index
    %c0_0 = arith.constant 0 : index
    %0 = vector.load %arg1[%c0, %c0_0] : memref<8x48xbf16, #tpu.memory_space<vmem>>, vector<8x48xbf16>
    %c0_1 = arith.constant 0 : index
    %c0_2 = arith.constant 0 : index
    %1 = vector.load %arg0[%c0_1, %c0_2] : memref<48x512xbf16, #tpu.memory_space<vmem>>, vector<48x512xbf16>
    %cst = arith.constant dense<0.000000e+00> : vector<8x512xf32>
    %2 = tpu.matmul %0, %1, %cst {dimension_numbers = #tpu.dot_dimension_numbers<[1], [0], [0], [1], [0, 0, 1, 1], [], []>} : vector<8x48xbf16>, vector<48x512xbf16>, vector<8x512xf32> -> vector<8x512xf32>
    %c0_3 = arith.constant 0 : index
    %c0_4 = arith.constant 0 : index
    %3 = vector.load %arg2[%c0_3, %c0_4] : memref<8x1xf32, #tpu.memory_space<vmem>>, vector<8x1xf32>
    %4 = vector.broadcast %3 : vector<8x1xf32> to vector<8x512xf32>
    %5 = arith.addf %2, %4 : vector<8x512xf32>
    %cst_5 = arith.constant 0.000000e+00 : f32
    %6 = vector.broadcast %cst_5 : f32 to vector<8x512xf32>
    %7 = arith.maximumf %5, %6 : vector<8x512xf32>
    %c0_6 = arith.constant 0 : index
    %c0_7 = arith.constant 0 : index
    %8 = vector.load %arg3[%c0_6, %c0_7] : memref<8x512xf32, #tpu.memory_space<vmem>>, vector<8x512xf32>
    tpu.vector_store %arg3[%c0_6, %c0_7], %7 {strides = array<i32>} : memref<8x512xf32, #tpu.memory_space<vmem>>, vector<8x512xf32>,
    return
  }
}

</mosaic_0001>

<llo_original>
// kernel: _forward_nchw.1
$region0: #{_forward_nchw.1}
  #allocation0 [shape = 'u32[]', space=smem, size = 0x4, offset = 0x4, fixed_abs, tag = 'smem constant byte address 0x4 - core index']
  #allocation1 [shape = 'u32[144,128]{1,0:T(1,128)}', space=vmem, size = 0x12000, scoped, tag = 'internal scratch']
  %s0 = inlined_call_operand.vmem [shape: bf16[48,512], index: 0, kind: input, shape index: {}]
  %s1 = inlined_call_operand.vmem [shape: bf16[8,48], index: 1, kind: input, shape index: {}]
  %s2 = inlined_call_operand.vmem [shape: f32[8,1], index: 2, kind: input, shape index: {}]
  %s3 = inlined_call_operand.vmem [shape: f32[8,512], index: 3, kind: output, shape index: {}]
  %s4 = sld [smem:[#allocation0]]
  $region22: #{_forward_nchw.1} parent=0
    _
  %s6 = ssub.s32 1, %s4
  %s7 = scalar_select 0, %s6, %s4
  // Predicated region
  $region2: #{_forward_nchw.1} parent=0 // pred_check
    _
  $region3: #{_forward_nchw.1} parent=0 // pred_check_branch
    %9 = sbr.rel (0) target = $region5
  $region4: #{_forward_nchw.1} parent=0 // pred_region
    _
  $region5: #{_forward_nchw.1} parent=0 // pred_fallthru
    _
  // Predicated region
  $region6: #{_forward_nchw.1} parent=0 // pred_check
    _
  $region7: #{_forward_nchw.1} parent=0 // pred_check_branch
    %11 = sbr.rel (0) target = $region9
  $region8: #{_forward_nchw.1} parent=0 // pred_region
    _
  $region9: #{_forward_nchw.1} parent=0 // pred_fallthru
    _
  // Predicated region
  $region10: #{_forward_nchw.1} parent=0 // pred_check
    _
  $region11: #{_forward_nchw.1} parent=0 // pred_check_branch
    %13 = sbr.rel (0) target = $region13
  $region12: #{_forward_nchw.1} parent=0 // pred_region
    _
  $region13: #{_forward_nchw.1} parent=0 // pred_fallthru
    _
  %v15 = vld [vmem:[%s1] sm:$0xf]
  %v16 = vld [vmem:[%s0] sm:$0xff]
  %v17 = vld [vmem:[%s0 + $0x8] sm:$0xff]
  %v18 = vld [vmem:[%s0 + $0x10] sm:$0xff]
  %v19 = vld [vmem:[%s0 + $0x18] sm:$0xff]
  %v20 = vld [vmem:[%s0 + $0x20] sm:$0xff]
  %v21 = vld [vmem:[%s0 + $0x28] sm:$0xff]
  %v22 = vld [vmem:[%s0 + $0x30] sm:$0xff]
  %v23 = vld [vmem:[%s0 + $0x38] sm:$0xff]
  %v24 = vld [vmem:[%s0 + $0x40] sm:$0xff]
  %v25 = vld [vmem:[%s0 + $0x48] sm:$0xff]
  %v26 = vld [vmem:[%s0 + $0x50] sm:$0xff]
  %v27 = vld [vmem:[%s0 + $0x58] sm:$0xff]
  %v28 = vld [vmem:[%s2] sm:$0xff]
  %30 = vset.pattern.permute.xlu0 0
  %31 = vperm.xlu0 %30, %v28
  %v32 = vpop.permute.xlu0 %31
  %v46 = vunpack.c.l.b16 %v16
  %v47 = vunpack.c.h.b16 %v16
  %v48 = vunpack.c.l.b16 %v17
  %v49 = vunpack.c.h.b16 %v17
  %v50 = vunpack.c.l.b16 %v18
  %v51 = vunpack.c.h.b16 %v18
  %v52 = vunpack.c.l.b16 %v19
  %v53 = vunpack.c.h.b16 %v19
  %v54 = vunpack.c.l.b16 %v20
  %v55 = vunpack.c.h.b16 %v20
  %v56 = vunpack.c.l.b16 %v21
  %v57 = vunpack.c.h.b16 %v21
  %v58 = vunpack.c.l.b16 %v22
  %v59 = vunpack.c.h.b16 %v22
  %v60 = vunpack.c.l.b16 %v23
  %v61 = vunpack.c.h.b16 %v23
  %v62 = vunpack.c.l.b16 %v24
  %v63 = vunpack.c.h.b16 %v24
  %v64 = vunpack.c.l.b16 %v25
  %v65 = vunpack.c.h.b16 %v25
  %v66 = vunpack.c.l.b16 %v26
  %v67 = vunpack.c.h.b16 %v26
  %v68 = vunpack.c.l.b16 %v27
  %v69 = vunpack.c.h.b16 %v27
  %v70 = vpack.c.b16 %v50, %v46
  %v71 = vpack.c.b16 %v51, %v47
  %v72 = vpack.c.b16 %v52, %v48
  %v73 = vpack.c.b16 %v53, %v49
  %v74 = vpack.c.b16 %v58, %v54
  %v75 = vpack.c.b16 %v59, %v55
  %v76 = vpack.c.b16 %v60, %v56
  %v77 = vpack.c.b16 %v61, %v57
  %v78 = vpack.c.b16 %v66, %v62
  %v79 = vpack.c.b16 %v67, %v63
  %v80 = vpack.c.b16 %v68, %v64
  %v81 = vpack.c.b16 %v69, %v65
  %vm94 = vcmask 392192
  %v96 = vsel %vm94, %v15, 0
  %98 = vmatprep.subr.bf16.mxu0 0
  %99 = vmatpush1.bf16.msra.mxu0 0
  %100 = vmatprep.subr.bf16.mxu0 0
  %101 = vmatpush1.bf16.msra.mxu0 0
  %102 = vmatprep.subr.bf16.mxu0 0
  %103 = vmatpush1.bf16.msra.mxu0 0
  %104 = vmatprep.subr.bf16.mxu0 0
  %105 = vmatpush1.bf16.msra.mxu0 0
  %106 = vmatprep.subr.bf16.mxu0 0
  %107 = vmatpush1.bf16.msra.mxu0 0
  %108 = vmatprep.subr.bf16.mxu0 %v79
  %109 = vmatpush1.bf16.msra.mxu0 %v78
  %110 = vmatprep.subr.bf16.mxu0 %v75
  %111 = vmatpush1.bf16.msra.mxu0 %v74
  %112 = vmatprep.subr.bf16.mxu0 %v71
  %113 = vmatpush1.bf16.msra.mxu0 %v70
  %114 = vmatprep.subr.bf16.mxu0 0
  %115 = vmatpush2.bf16.msra.mxu0 0
  %116 = vmatprep.subr.bf16.mxu0 0
  %117 = vmatpush2.bf16.msra.mxu0 0
  %118 = vmatprep.subr.bf16.mxu0 0
  %119 = vmatpush2.bf16.msra.mxu0 0
  %120 = vmatprep.subr.bf16.mxu0 0
  %121 = vmatpush2.bf16.msra.mxu0 0
  %122 = vmatprep.subr.bf16.mxu0 0
  %123 = vmatpush2.bf16.msra.mxu0 0
  %124 = vmatprep.subr.bf16.mxu0 0
  %125 = vmatpush2.bf16.msra.mxu0 0
  %126 = vmatprep.subr.bf16.mxu0 0
  %127 = vmatpush2.bf16.msra.mxu0 0
  %128 = vmatprep.subr.bf16.mxu0 0
  %129 = vmatpush2.bf16.msra.mxu0 0
  %130 = vmatprep.mubr.bf16.mxu0 0
  %131 = vmatmul.mubr.bf16.gmra.mxu0 %v96
  %v132 = vpop.f32.mrf.mxu0
  %v133 = vadd.f32 %v32, %v132
  %v134 = vpop.f32.mrf.mxu0
  %v135 = vadd.f32 %v32, %v134
  %v136 = vpop.f32.mrf.mxu0
  %v137 = vpop.f32.mrf.mxu0
  %138 = vdwg.mxu0
  %139 = vmatprep.subr.bf16.mxu0 0
  %140 = vmatpush1.bf16.msra.mxu0 0
  %141 = vmatprep.subr.bf16.mxu0 0
  %142 = vmatpush1.bf16.msra.mxu0 0
  %143 = vmatprep.subr.bf16.mxu0 0
  %144 = vmatpush1.bf16.msra.mxu0 0
  %145 = vmatprep.subr.bf16.mxu0 0
  %146 = vmatpush1.bf16.msra.mxu0 0
  %147 = vmatprep.subr.bf16.mxu0 0
  %148 = vmatpush1.bf16.msra.mxu0 0
  %149 = vmatprep.subr.bf16.mxu0 %v81
  %150 = vmatpush1.bf16.msra.mxu0 %v80
  %151 = vmatprep.subr.bf16.mxu0 %v77
  %152 = vmatpush1.bf16.msra.mxu0 %v76
  %153 = vmatprep.subr.bf16.mxu0 %v73
  %154 = vmatpush1.bf16.msra.mxu0 %v72
  %155 = vmatprep.subr.bf16.mxu0 0
  %156 = vmatpush2.bf16.msra.mxu0 0
  %157 = vmatprep.subr.bf16.mxu0 0
  %158 = vmatpush2.bf16.msra.mxu0 0
  %159 = vmatprep.subr.bf16.mxu0 0
  %160 = vmatpush2.bf16.msra.mxu0 0
  %161 = vmatprep.subr.bf16.mxu0 0
  %162 = vmatpush2.bf16.msra.mxu0 0
  %163 = vmatprep.subr.bf16.mxu0 0
  %164 = vmatpush2.bf16.msra.mxu0 0
  %165 = vmatprep.subr.bf16.mxu0 0
  %166 = vmatpush2.bf16.msra.mxu0 0
  %167 = vmatprep.subr.bf16.mxu0 0
  %168 = vmatpush2.bf16.msra.mxu0 0
  %169 = vmatprep.subr.bf16.mxu0 0
  %170 = vmatpush2.bf16.msra.mxu0 0
  %171 = vmatprep.mubr.bf16.mxu0 0
  %172 = vmatmul.mubr.bf16.gmra.mxu0 %v96
  %v173 = vpop.f32.mrf.mxu0
  %v174 = vadd.f32 %v32, %v173
  %v175 = vpop.f32.mrf.mxu0
  %v176 = vadd.f32 %v32, %v175
  %v177 = vpop.f32.mrf.mxu0
  %v178 = vpop.f32.mrf.mxu0
  %179 = vdwg.mxu0
  %v180 = vmax.f32 %v133, 0.0
  %v181 = vmax.f32 %v135, 0.0
  %v182 = vmax.f32 %v174, 0.0
  %v183 = vmax.f32 %v176, 0.0
  %184 = vst [vmem:[%s3] sm:$0xff] %v180
  %185 = vst [vmem:[%s3 + $0x8] sm:$0xff] %v181
  %186 = vst [vmem:[%s3 + $0x10] sm:$0xff] %v182
  %187 = vst [vmem:[%s3 + $0x18] sm:$0xff] %v183
  // Predicated region
  $region14: #{_forward_nchw.1} parent=0 // pred_check
    _
  $region15: #{_forward_nchw.1} parent=0 // pred_check_branch
    %189 = sbr.rel (0) target = $region17
  $region16: #{_forward_nchw.1} parent=0 // pred_region
    _
  $region17: #{_forward_nchw.1} parent=0 // pred_fallthru
    _
  // Predicated region
  $region18: #{_forward_nchw.1} parent=0 // pred_check
    _
  $region19: #{_forward_nchw.1} parent=0 // pred_check_branch
    %191 = sbr.rel (0) target = $region21
  $region20: #{_forward_nchw.1} parent=0 // pred_region
    _
  $region21: #{_forward_nchw.1} parent=0 // pred_fallthru
    _

</llo_original>
